<compile_context>
chip_gen: v7x
topology: tpu7x:2x2x1
jax: 0.10.0
libtpu: 0.0.40
codegen_flags: <defaults>
</compile_context>

<pallas_src>
import jax
import jax.numpy as jnp
from jax.experimental import pallas as pl
from jax.experimental.pallas import tpu as pltpu


def _identity_dma_kernel(x_hbm, o_hbm):
    # One contiguous HBM -> HBM DMA of the whole tensor; no VMEM bounce.
    def _copy(sem):
        cp = pltpu.make_async_copy(x_hbm, o_hbm, sem)
        cp.start()
        cp.wait()

    pl.run_scoped(_copy, pltpu.SemaphoreType.DMA(()))


def identity_feature_extractor(x):
    """Pallas identity forward: returns `x` unchanged (same shape & dtype)."""
    return pl.pallas_call(
        _identity_dma_kernel,
        out_shape=jax.ShapeDtypeStruct(x.shape, x.dtype),
        in_specs=[pl.BlockSpec(memory_space=pl.ANY)],
        out_specs=pl.BlockSpec(memory_space=pl.ANY),
    )(x)


if __name__ == "__main__":
    key = jax.random.PRNGKey(0)

    # Primary check: feature-extractor style input (B, C, H, W), f32.
    x = jax.random.normal(key, (2, 4, 16, 16), jnp.float32)
    fwd = jax.jit(identity_feature_extractor)
    out = fwd(x)
    jax.block_until_ready(out)
    assert out.shape == x.shape, (out.shape, x.shape)
    assert out.dtype == x.dtype, (out.dtype, x.dtype)
    assert bool(jnp.array_equal(out, x)), "identity output mismatch (f32)"

    # Secondary check: odd, non-tile-aligned shape and packed dtype — the
    # HBM->HBM DMA path needs no padding or dtype-specific tiling.
    y = jax.random.normal(jax.random.PRNGKey(1), (3, 5, 7), jnp.bfloat16)
    out_y = jax.jit(identity_feature_extractor)(y)
    jax.block_until_ready(out_y)
    assert out_y.shape == y.shape and out_y.dtype == y.dtype
    assert bool(jnp.array_equal(out_y, y)), "identity output mismatch (bf16)"

    print("KERNEL_OK")
</pallas_src>

<mosaic_0001>
module attributes {stable_mosaic.version = 11 : i64} {
  func.func @_identity_dma_kernel(%arg0: memref<2x4x16x16xf32, #tpu.memory_space<any>>, %arg1: memref<2x4x16x16xf32, #tpu.memory_space<any>>) attributes {dimension_semantics = [], scalar_prefetch = 0 : i64, scratch_operands = 0 : i64, tpu.core_type = #tpu.core_type<tc>} {
    "tpu.region"() ({
      %0 = tpu.sem_alloc : memref<!tpu.dma_semaphore, #tpu.memory_space<semaphore_mem>>
      tpu.enqueue_dma source(%arg0 : memref<2x4x16x16xf32, #tpu.memory_space<any>>) target(%arg1 : memref<2x4x16x16xf32, #tpu.memory_space<any>>) target_semaphore(%0 : memref<!tpu.dma_semaphore, #tpu.memory_space<semaphore_mem>>)
      tpu.wait_dma2 semaphore(%0 : memref<!tpu.dma_semaphore, #tpu.memory_space<semaphore_mem>>) src(%arg0 : memref<2x4x16x16xf32, #tpu.memory_space<any>>) dst(%arg1 : memref<2x4x16x16xf32, #tpu.memory_space<any>>)
      tpu.yield
    }) : () -> ()
    return
  }
}

</mosaic_0001>

<llo_original>
// kernel: identity_feature_extractor.1
$region0: #{identity_feature_extractor.1}
  #allocation0 [shape = 'u32[]', space=smem, size = 0x4, offset = 0x4, fixed_abs, tag = 'smem constant byte address 0x4 - core index']
  #allocation1 [shape = 'u32[144,128]{1,0:T(1,128)}', space=vmem, size = 0x12000, scoped, tag = 'internal scratch']
  #allocation3 [shape = 's32[]', space=sflag, size = 0x4, offset = 0, fixed_abs, tag = 'sflag constant byte address 0x0 - dummy sync flag']
  #allocation4 [shape = 'u32[0]{0}', space=smem, size = 0, offset = 0, fixed_abs, tag = 'smem constant byte address 0x0 - null']
  %s0 = inlined_call_operand.hbm [shape: f32[2,4,16,16], index: 0, kind: input, shape index: {}]
  %s1 = inlined_call_operand.hbm [shape: f32[2,4,16,16], index: 1, kind: output, shape index: {}]
  %s2 = sld [smem:[#allocation0]]
  $region3: #{identity_feature_extractor.1} parent=0
    _
  %s4 = ssub.s32 1, %s2
  %s5 = scalar_select 0, %s4, %s2
  $region2: #{identity_feature_extractor.1} parent=0
    #allocation2 [shape = 's32[1]{0}', space=sflag, size = 0x4, scoped, tag = 'scoped memory for identity_feature_extractor.1']
    %s7 = sshll.u32 1, 14
    %s8 = sxor.u32 4294967295, %s7
    %s11 = sshll.u32 3, 24
    %s12 = sxor.u32 4294967295, %s11
    %s13 = sand.u32 0, %s12
    %s15 = sor.u32 %s13, 0
    %18 = dma.general %s0, 2048, %s1, [#allocation2], [#allocation3], [#allocation4], %s15, 0
    %s19 = smul.u32 2, 4
    %s20 = smul.u32 %s19, 16
    %s21 = smul.u32 %s20, 1
    %s22 = sshll.u32 %s21, 4
    %23 = dma.done [#allocation2], %s22

</llo_original>
